<compile_context>
chip_gen: v7x
topology: tpu7x:2x2x1
jax: 0.10.0
libtpu: 0.0.40
codegen_flags: <defaults>
</compile_context>

<pallas_src>
import math

import jax
import jax.numpy as jnp
from jax.experimental import pallas as pl
from jax.experimental.pallas import tpu as pltpu

_LANE = 128
_DEFAULT_BLOCK_BUDGET = 6 << 20       # ~6 MiB output block: amortizes the ~0.35 us/step
                                      # grid overhead even at v7x's 3.2 TB/s HBM.
_DEFAULT_VMEM_LIMIT = 48 << 20        # explicit scoped-VMEM limit; v7x scoped default is
                                      # only 32 of 64 MiB, so set it rather than assume.
_DEFAULT_MIN_KERNEL_BYTES = 256 << 10 # below this, a pallas_call is pure overhead.


def _build_pe_table(seq_length: int, d_model: int) -> jnp.ndarray:
    """Deterministic sinusoidal PE buffer, matching VanillaPosEnc.__init__.

    Note: keeps math.log(100000.0) (not the canonical 10000.0) to match the source
    module exactly.
    """
    pos = jnp.arange(seq_length, dtype=jnp.float32)[:, None]                  # (S, 1)
    in_term = jnp.exp(
        jnp.arange(0, d_model, 2, dtype=jnp.float32)
        * (-math.log(100000.0) / d_model)
    )                                                                          # (D/2,)
    angles = pos * in_term                                                     # (S, D/2)
    pe = jnp.zeros((seq_length, d_model), dtype=jnp.float32)
    pe = pe.at[:, 0::2].set(jnp.sin(angles))
    pe = pe.at[:, 1::2].set(jnp.cos(angles))
    return pe                                                                  # (S, D)


def _sublane_multiple(itemsize: int) -> int:
    """Row-tile alignment: sub-32-bit dtypes pack along sublanes
    (f32 vreg = [8,128], bf16 = [16,128], int8/fp8 = [32,128])."""
    return 8 * max(1, 4 // max(1, itemsize))


def _pick_row_tile(rows: int, sub: int, cap: int = 256) -> int:
    """Smallish row tile (bias tiles lane-wide, not row-tall): multiple of `sub`,
    exact divisor of rows; otherwise full extent (always legal per the (8,128) rule)."""
    if rows <= cap or rows % sub != 0:
        return rows
    tb = (cap // sub) * sub
    while rows % tb != 0:       # terminates: sub divides rows
        tb -= sub
    return tb


def _pick_lane_tile(n_lanes: int, tb: int, itemsize: int, budget_bytes: int) -> int:
    """Largest multiple-of-128 divisor of n_lanes with tb*tc*itemsize <= budget."""
    if n_lanes % _LANE != 0:
        # (8,128) rule: a lane dim that isn't a multiple of 128 must be the full extent.
        return n_lanes
    max_lanes = max(_LANE, budget_bytes // max(1, tb * itemsize))
    tc = max(_LANE, min(n_lanes, (max_lanes // _LANE) * _LANE))
    while n_lanes % tc != 0:    # terminates: 128 divides n_lanes
        tc -= _LANE
    return tc


def _posenc_kernel(pe_ref, e_ref, o_ref):
    # pe_ref: (1, TC) in the output dtype; e_ref / o_ref: (TB, TC).
    # Sublane-broadcast add on the VPU, single full-tile store.
    o_ref[...] = (e_ref[...].astype(o_ref.dtype) + pe_ref[...]).astype(o_ref.dtype)


def vanilla_pos_enc(E: jnp.ndarray, PE: jnp.ndarray, *,
                    out_dtype=None, donate_e: bool = False,
                    block_budget_bytes: int = _DEFAULT_BLOCK_BUDGET,
                    vmem_limit_bytes: int = _DEFAULT_VMEM_LIMIT,
                    min_kernel_bytes: int = _DEFAULT_MIN_KERNEL_BYTES) -> jnp.ndarray:
    """Pallas equivalent of VanillaPosEnc.forward: PE[:, :E.shape[1], :] + E."""
    B, S, D = E.shape
    if PE.ndim == 3:            # accept the module's registered (1, S, D) buffer layout
        PE = PE[0]
    N = S * D

    # PyTorch semantics: f32 buffer + E promotes (bf16 E -> f32 out).
    if out_dtype is None:
        out_dtype = jnp.promote_types(E.dtype, PE.dtype)
    out_dtype = jnp.dtype(out_dtype)
    e_item = jnp.dtype(E.dtype).itemsize
    o_item = out_dtype.itemsize

    pe_slice = PE[:S, :].astype(out_dtype)   # no-op cast for the usual f32 buffer
    total_out_bytes = B * N * o_item

    def _jax_fallback():
        return (E.astype(out_dtype) + pe_slice[None, :, :]).astype(out_dtype)

    # Small-input bypass: pallas_call + pipeline prologue is pure overhead below a few
    # hundred KiB, and it blocks XLA from fusing the add into neighbouring ops.
    if total_out_bytes < min_kernel_bytes:
        return _jax_fallback()

    # Lane-dense flattened view; reshapes are metadata-only in XLA.
    pe_flat = pe_slice.reshape(1, N)
    e_flat = E.reshape(B, N)

    sub = _sublane_multiple(min(e_item, o_item))
    tb = _pick_row_tile(B, sub)
    tc = _pick_lane_tile(N, tb, o_item, block_budget_bytes)
    nr, nc = B // tb, N // tc

    # v7x has 2 TensorCores: with a collapsed grid=(1,1) only one core drives HBM.
    # Split one parallel axis when there is enough work to shard.
    if nr * nc == 1 and total_out_bytes >= (1 << 20):
        if B % (2 * sub) == 0:
            tb = B // 2
        elif N % (2 * _LANE) == 0:
            tc = N // 2
        nr, nc = B // tb, N // tc

    # Degenerate-shape guard (e.g. N % 128 != 0 forces a full-extent lane tile): if the
    # double-buffered working set would blow past the scoped-VMEM limit, fall back.
    working_set = 2 * (tb * tc * (e_item + o_item) + tc * o_item)
    if working_set > int(0.9 * vmem_limit_bytes):
        return _jax_fallback()

    extra = {}
    if donate_e and out_dtype == jnp.dtype(E.dtype):
        # Alias E with the output (same shape & dtype): removes a B*N HBM allocation.
        extra["input_output_aliases"] = {1: 0}

    out_flat = pl.pallas_call(
        _posenc_kernel,
        out_shape=jax.ShapeDtypeStruct((B, N), out_dtype),
        grid_spec=pltpu.PrefetchScalarGridSpec(
            num_scalar_prefetch=0,
            # Lane-chunk axis outermost: the PE block index is constant across the inner
            # row axis, so Pallas skips re-DMA of PE on consecutive steps -> PE is read
            # from HBM exactly once (optimal traffic: read PE + E, write out).
            grid=(nc, nr),
            in_specs=[
                pl.BlockSpec((1, tc), lambda c, r: (0, c)),    # PE chunk (row-broadcast)
                pl.BlockSpec((tb, tc), lambda c, r: (r, c)),   # E tile
            ],
            out_specs=pl.BlockSpec((tb, tc), lambda c, r: (r, c)),
        ),
        compiler_params=pltpu.CompilerParams(
            # Both axes independent -> grid shards across v7x's 2 TensorCores;
            # harmless on single-TC v5e/v6e.
            dimension_semantics=("parallel", "parallel"),
            vmem_limit_bytes=vmem_limit_bytes,
        ),
        **extra,
    )(pe_flat, e_flat)

    # TODO(synk): for very small B the PE read (1/(2B+1) of traffic) could be removed by
    # computing sin/cos in-kernel on the otherwise-idle EUP; low priority.
    return out_flat.reshape(B, S, D)


if __name__ == "__main__":
    # Module config (deterministic "parameters": the PE buffer).
    seq_length, d_model, batch = 8, 32, 2
    PE = _build_pe_table(seq_length, d_model)

    key = jax.random.PRNGKey(0)
    E = jax.random.normal(key, (batch, seq_length, d_model), dtype=jnp.float32)

    # min_kernel_bytes=0 forces the Pallas path even at this tiny demo size.
    out = jax.block_until_ready(vanilla_pos_enc(E, PE, min_kernel_bytes=0))
    ref = PE[None, :seq_length, :] + E
    assert out.shape == E.shape and out.dtype == ref.dtype
    assert jnp.allclose(out, ref, atol=1e-6), "mismatch vs reference (f32)"

    # Second check: multi-step grid + bf16 input promoting to f32 (PyTorch buffer semantics).
    B2, S2, D2 = 16, 128, 128
    PE2 = _build_pe_table(S2, D2)
    E2 = jax.random.normal(jax.random.PRNGKey(1), (B2, S2, D2), dtype=jnp.bfloat16)
    out2 = jax.block_until_ready(vanilla_pos_enc(E2, PE2, min_kernel_bytes=0))
    ref2 = PE2[None, :, :] + E2.astype(jnp.float32)
    assert out2.dtype == jnp.float32
    assert jnp.allclose(out2, ref2, atol=1e-5), "mismatch vs reference (bf16 -> f32)"

    print("KERNEL_OK")
</pallas_src>

<mosaic_0001>
module attributes {stable_mosaic.version = 11 : i64} {
  func.func @_posenc_kernel(%arg0: i32, %arg1: i32, %arg2: memref<1x256xf32, #tpu.memory_space<vmem>>, %arg3: memref<2x256xf32, #tpu.memory_space<vmem>>, %arg4: memref<2x256xf32, #tpu.memory_space<vmem>>) attributes {dimension_semantics = [#tpu.dimension_semantics<parallel>, #tpu.dimension_semantics<parallel>], iteration_bounds = array<i64: 1, 1>, scalar_prefetch = 0 : i64, scratch_operands = 0 : i64, tpu.core_type = #tpu.core_type<tc>, window_params = [{transform_indices = @transform_0, window_bounds = array<i64: 1, 256>}, {transform_indices = @transform_1, window_bounds = array<i64: 2, 256>}, {transform_indices = @transform_2, window_bounds = array<i64: 2, 256>}]} {
    %c0 = arith.constant 0 : index
    %c0_0 = arith.constant 0 : index
    %0 = vector.load %arg3[%c0, %c0_0] : memref<2x256xf32, #tpu.memory_space<vmem>>, vector<2x256xf32>
    %c0_1 = arith.constant 0 : index
    %c0_2 = arith.constant 0 : index
    %1 = vector.load %arg2[%c0_1, %c0_2] : memref<1x256xf32, #tpu.memory_space<vmem>>, vector<1x256xf32>
    %2 = vector.broadcast %1 : vector<1x256xf32> to vector<2x256xf32>
    %3 = arith.addf %0, %2 : vector<2x256xf32>
    %c0_3 = arith.constant 0 : index
    %c0_4 = arith.constant 0 : index
    %4 = vector.load %arg4[%c0_3, %c0_4] : memref<2x256xf32, #tpu.memory_space<vmem>>, vector<2x256xf32>
    tpu.vector_store %arg4[%c0_3, %c0_4], %3 {strides = array<i32>} : memref<2x256xf32, #tpu.memory_space<vmem>>, vector<2x256xf32>,
    return
  }
  func.func @transform_0(%arg0: i32, %arg1: i32) -> (i32, i32) {
    %c0_i32 = arith.constant 0 : i32
    %c0_i32_0 = arith.constant 0 : i32
    return %c0_i32, %arg0 : i32, i32
  }
  func.func @transform_1(%arg0: i32, %arg1: i32) -> (i32, i32) {
    %c0_i32 = arith.constant 0 : i32
    return %arg1, %arg0 : i32, i32
  }
  func.func @transform_2(%arg0: i32, %arg1: i32) -> (i32, i32) {
    %c0_i32 = arith.constant 0 : i32
    return %arg1, %arg0 : i32, i32
  }
}

</mosaic_0001>

<llo_original>
// kernel: tpu_custom_call.1
$region0: #{tpu_custom_call.1}
  #allocation0 [shape = 'u32[]', space=smem, size = 0x4, offset = 0x4, fixed_abs, tag = 'smem constant byte address 0x4 - core index']
  #allocation1 [shape = 'u32[144,128]{1,0:T(1,128)}', space=vmem, size = 0x12000, scoped, tag = 'internal scratch']
  %s0 = inlined_call_operand.hbm [shape: f32[1,256], index: 0, kind: input, shape index: {}]
  %s1 = inlined_call_operand.hbm [shape: f32[2,256], index: 1, kind: input, shape index: {}]
  %s2 = inlined_call_operand.hbm [shape: f32[2,256], index: 2, kind: output, shape index: {}]
  %s3 = sld [smem:[#allocation0]]
  $region26: #{tpu_custom_call.1} parent=0
    _
  %s5 = ssub.s32 1, %s3
  %s6 = scalar_select 0, %s5, %s3
  $region1: #{tpu_custom_call.1} parent=0
    #allocation2 [shape = 'u8[1024]{0}', space=vmem, size = 0x400, scoped, tag = 'input window, operand 0, single buffered']
    #allocation3 [shape = 's32[1]{0}', space=sflag, size = 0x4, scoped, tag = 'scoped memory for tpu_custom_call.1']
    #allocation4 [shape = 's32[1]{0}', space=sflag, size = 0x4, scoped, tag = 'scoped memory for tpu_custom_call.1']
    #allocation5 [shape = 'u8[2048]{0}', space=vmem, size = 0x800, scoped, tag = 'input window, operand 1, single buffered']
    #allocation6 [shape = 's32[1]{0}', space=sflag, size = 0x4, scoped, tag = 'scoped memory for tpu_custom_call.1']
    #allocation7 [shape = 'u8[2048]{0}', space=vmem, size = 0x800, scoped, tag = 'output window, operand 0, single buffered']
    %7 = vsyncpa [#allocation3], 0
    %8 = vsyncpa [#allocation6], 0
    %9 = vsyncpa [#allocation4], 0
    // Predicated region
    $region2: #{tpu_custom_call.1} parent=1 // pred_check
      _
    $region3: #{tpu_custom_call.1} parent=1 // pred_check_branch
      %11 = sbr.rel (0) target = $region5
    $region4: #{tpu_custom_call.1} parent=1 // pred_region
      %s13 = ssub.s32 32, 32
      %14 = vsyncadd [#allocation3], %s13
      %s16 = sshll.u32 [#allocation2], 4
      %s17 = int_to_ptr.vmem [resolvable:$true] %s16
      %19 = dma.hbm_to_vmem [thread:$0]  %s0, 32, %s17, [#allocation3]
    $region5: #{tpu_custom_call.1} parent=1 // pred_fallthru
      _
    // Predicated region
    $region6: #{tpu_custom_call.1} parent=1 // pred_check
      _
    $region7: #{tpu_custom_call.1} parent=1 // pred_check_branch
      %21 = sbr.rel (0) target = $region9
    $region8: #{tpu_custom_call.1} parent=1 // pred_region
      %s23 = ssub.s32 64, 64
      %24 = vsyncadd [#allocation6], %s23
      %s26 = sshll.u32 [#allocation5], 4
      %s27 = int_to_ptr.vmem [resolvable:$true] %s26
      %29 = dma.hbm_to_vmem [thread:$0]  %s1, 64, %s27, [#allocation6]
    $region9: #{tpu_custom_call.1} parent=1 // pred_fallthru
      _
    // Predicated region
    $region10: #{tpu_custom_call.1} parent=1 // pred_check
      _
    $region11: #{tpu_custom_call.1} parent=1 // pred_check_branch
      %31 = sbr.rel (0) target = $region13
    $region12: #{tpu_custom_call.1} parent=1 // pred_region
      %32 = dma.done [#allocation3], 32
    $region13: #{tpu_custom_call.1} parent=1 // pred_fallthru
      _
    // Predicated region
    $region14: #{tpu_custom_call.1} parent=1 // pred_check
      _
    $region15: #{tpu_custom_call.1} parent=1 // pred_check_branch
      %34 = sbr.rel (0) target = $region17
    $region16: #{tpu_custom_call.1} parent=1 // pred_region
      %35 = dma.done [#allocation6], 64
    $region17: #{tpu_custom_call.1} parent=1 // pred_fallthru
      _
    %v36 = vld [vmem:[#allocation5] sm:$0xf]
    %v37 = vld [vmem:[#allocation2] sm:$0x3]
    %v39 = vlaneseq
    %v40 = vshrl.u32 %v39, 7
    %v41 = vsub.s32 0, %v40
    %v42 = vrot.slane %v37, %v41
    %v43 = vlaneseq
    %v44 = vshrl.u32 %v43, 7
    %v45 = vsub.s32 1, %v44
    %v46 = vrot.slane %v37, %v45
    %v47 = vcombine.low %v42, %v46
    %v49 = vunpack.c.l.s4 1983009808
    %v50 = vunpack.c.0.s8 %v49
    %v51 = vlaneseq
    %v52 = vshrl.u32 %v51, 7
    %v53 = vsub.s32 %v50, %v52
    %v54 = vrot.slane %v47, %v53
    %v56 = vadd.f32 %v36, %v54
    %57 = vst [vmem:[#allocation7] sm:$0xf] %v56
    // Predicated region
    $region18: #{tpu_custom_call.1} parent=1 // pred_check
      _
    $region19: #{tpu_custom_call.1} parent=1 // pred_check_branch
      %59 = sbr.rel (0) target = $region21
    $region20: #{tpu_custom_call.1} parent=1 // pred_region
      %s61 = ssub.s32 64, 64
      %62 = vsyncadd [#allocation4], %s61
      %s64 = sshll.u32 [#allocation7], 4
      %s65 = int_to_ptr.vmem [resolvable:$true] %s64
      %67 = dma.vmem_to_hbm [thread:$0]  %s65, 64, %s2, [#allocation4]
    $region21: #{tpu_custom_call.1} parent=1 // pred_fallthru
      _
    // Predicated region
    $region22: #{tpu_custom_call.1} parent=1 // pred_check
      _
    $region23: #{tpu_custom_call.1} parent=1 // pred_check_branch
      %69 = sbr.rel (0) target = $region25
    $region24: #{tpu_custom_call.1} parent=1 // pred_region
      %70 = dma.done [#allocation4], 64
    $region25: #{tpu_custom_call.1} parent=1 // pred_fallthru
      _
    %71 = vsyncpa [#allocation3], 1
    %72 = vsyncpa [#allocation6], 1
    %73 = vsyncpa [#allocation4], 1

</llo_original>
